<compile_context>
chip_gen: v5e
topology: v5e:2x2
jax: 0.10.0
libtpu: 0.0.40
codegen_flags: <defaults>
</compile_context>

<pallas_src>
import jax
import jax.numpy as jnp
from jax.experimental import pallas as pl
from jax.experimental.pallas import tpu as pltpu

BN_EPS = 1e-5
# Safe on every generation (v5e default scoped 16 MiB, v6e/v7x 32 MiB default,
# v7x physical 64 MiB).  Raise toward 128 MiB on v5e/v6e for bigger tiles.
VMEM_LIMIT_BYTES = 32 * 1024 * 1024


def _silu(x):
    return x * jax.nn.sigmoid(x)


# ----------------------------- kernels ---------------------------------------


def _conv3_matmul(w_ref, x, stack_ref):
    """3-tap 'same' Conv1d as one MXU matmul: (Co, 3*Ci) x (3*Ci, L) -> f32.

    x: (Ci, L) bf16 (length on lanes).  Stack rows are [x[l-1] | x[l] | x[l+1]]
    with zero boundary columns; the +/-1 taps are formed in-register (lane
    shift via slice+concat) and written with a single aligned full store.
    """
    ci, L = x.shape
    zcol = jnp.zeros((ci, 1), x.dtype)
    left = jnp.concatenate([zcol, x[:, :L - 1]], axis=1)     # tap 0: x[l-1]
    right = jnp.concatenate([x[:, 1:], zcol], axis=1)        # tap 2: x[l+1]
    stack_ref[...] = jnp.concatenate([left, x, right], axis=0)
    return jnp.dot(w_ref[...], stack_ref[...], preferred_element_type=jnp.float32)


def _conv1_kernel(x_ref, w1_ref, h1_ref, stats_ref, stack_ref):
    # conv1 (bf16 MXU, f32 accumulate) + per-batch BN1 partial statistics.
    x = x_ref[0].astype(jnp.bfloat16)                 # cast in-kernel (no HBM f32 copy)
    h = _conv3_matmul(w1_ref, x, stack_ref)           # (Co, L) f32
    s = jnp.sum(h, axis=1, keepdims=True)             # f32 stats from f32 accumulator
    q = jnp.sum(h * h, axis=1, keepdims=True)
    stats_ref[0] = jnp.concatenate([s, q], axis=1)    # (Co, 2): [sum | sumsq]
    h1_ref[0] = h.astype(h1_ref.dtype)                # bf16 inter-pass activation


def _mid_kernel(h1_ref, ss_ref, w2_ref, h2_ref, stats_ref, stack_ref):
    # fused BN1+FiLM1 (precomputed per-(n,c) scale/shift) + SiLU, then conv2.
    ss = ss_ref[0]                                    # (Co, 2) f32: scale | shift
    a = h1_ref[0].astype(jnp.float32) * ss[:, 0:1] + ss[:, 1:2]
    a = _silu(a)
    h = _conv3_matmul(w2_ref, a.astype(jnp.bfloat16), stack_ref)
    s = jnp.sum(h, axis=1, keepdims=True)
    q = jnp.sum(h * h, axis=1, keepdims=True)
    stats_ref[0] = jnp.concatenate([s, q], axis=1)
    h2_ref[0] = h.astype(h2_ref.dtype)


def _final_kernel(h2_ref, ss_ref, out_ref):
    # fused BN2+FiLM2 + SiLU.
    ss = ss_ref[0]
    a = h2_ref[0].astype(jnp.float32) * ss[:, 0:1] + ss[:, 1:2]
    out_ref[0] = _silu(a).astype(out_ref.dtype)


# ----------------------------- wrapper ----------------------------------------


def _fused_scale_shift(stats, count, bn_w, bn_b, gamma, beta):
    """Fold training-mode BN (batch stats, biased var) and FiLM into one
    per-(batch, channel) affine y = scale*h + shift.  O(N*C).  Returns (N,C,2)."""
    s = jnp.sum(stats[:, :, 0], axis=0)               # (C,)
    q = jnp.sum(stats[:, :, 1], axis=0)
    mean = s / count
    var = jnp.maximum(q / count - mean * mean, 0.0)    # clamp: single-pass cancellation
    inv = jax.lax.rsqrt(var + BN_EPS)
    g = 1.0 + gamma                                    # (N, C)
    scale = g * (bn_w * inv)[None, :]
    shift = g * (bn_b - mean * inv * bn_w)[None, :] + beta
    return jnp.stack([scale, shift], axis=-1).astype(jnp.float32)   # (N, C, 2)


@jax.jit
def conv_block_forward(x_ncl, cond, params):
    N, Cin, L = x_ncl.shape
    Co = params["w1"].shape[0]
    f32, bf16 = jnp.float32, jnp.bfloat16
    count = float(N * L)
    xb = x_ncl.dtype.itemsize

    # Conv weights fused over taps, bf16 for the MXU: (Co, Ci, 3) -> (Co, 3*Ci),
    # K ordered [tap0 | tap1 | tap2] to match the in-kernel stack.
    # Conv biases dropped (exactly cancelled by training-mode BN).
    w1f = jnp.transpose(params["w1"], (0, 2, 1)).reshape(Co, 3 * Cin).astype(bf16)
    w2f = jnp.transpose(params["w2"], (0, 2, 1)).reshape(Co, 3 * Co).astype(bf16)

    # FiLM: silu(cond) once, one f32 matmul for both blocks' (gamma, beta).
    sc = _silu(cond.astype(f32))
    fw = jnp.concatenate([params["f1_w"], params["f2_w"]], axis=0)   # (4*Co, D)
    fb = jnp.concatenate([params["f1_b"], params["f2_b"]], axis=0)   # (4*Co,)
    gb = sc @ fw.T + fb                                              # (N, 4*Co)
    gamma1, beta1 = gb[:, 0:Co], gb[:, Co:2 * Co]
    gamma2, beta2 = gb[:, 2 * Co:3 * Co], gb[:, 3 * Co:4 * Co]

    cp = pltpu.CompilerParams(dimension_semantics=("parallel",),
                              vmem_limit_bytes=VMEM_LIMIT_BYTES)

    # ---- pass 1: conv1 (bf16 MXU) + per-batch BN1 partial stats ---------------
    cost1 = pl.CostEstimate(
        flops=2 * N * Co * 3 * Cin * L + 3 * N * Co * L,
        transcendentals=0,
        bytes_accessed=N * Cin * L * xb + Co * 3 * Cin * 2
                       + N * Co * L * 2 + N * Co * 2 * 4)
    h1, stats1 = pl.pallas_call(
        _conv1_kernel,
        grid=(N,),
        in_specs=[
            pl.BlockSpec((1, Cin, L), lambda n: (n, 0, 0)),
            pl.BlockSpec((Co, 3 * Cin), lambda n: (0, 0)),
        ],
        out_specs=(
            pl.BlockSpec((1, Co, L), lambda n: (n, 0, 0)),
            pl.BlockSpec((1, Co, 2), lambda n: (n, 0, 0)),
        ),
        out_shape=(
            jax.ShapeDtypeStruct((N, Co, L), bf16),
            jax.ShapeDtypeStruct((N, Co, 2), f32),
        ),
        scratch_shapes=[pltpu.VMEM((3 * Cin, L), bf16)],
        compiler_params=cp,
        cost_estimate=cost1,
    )(x_ncl, w1f)

    ss1 = _fused_scale_shift(stats1, count, params["bn1_w"], params["bn1_b"],
                             gamma1, beta1)

    # ---- pass 2: fused BN1+FiLM1+SiLU, conv2 (bf16 MXU), BN2 partial stats ----
    cost2 = pl.CostEstimate(
        flops=2 * N * Co * 3 * Co * L + 10 * N * Co * L,
        transcendentals=N * Co * L,
        bytes_accessed=N * Co * L * 2 + N * Co * 2 * 4 + Co * 3 * Co * 2
                       + N * Co * L * 2 + N * Co * 2 * 4)
    h2, stats2 = pl.pallas_call(
        _mid_kernel,
        grid=(N,),
        in_specs=[
            pl.BlockSpec((1, Co, L), lambda n: (n, 0, 0)),
            pl.BlockSpec((1, Co, 2), lambda n: (n, 0, 0)),
            pl.BlockSpec((Co, 3 * Co), lambda n: (0, 0)),
        ],
        out_specs=(
            pl.BlockSpec((1, Co, L), lambda n: (n, 0, 0)),
            pl.BlockSpec((1, Co, 2), lambda n: (n, 0, 0)),
        ),
        out_shape=(
            jax.ShapeDtypeStruct((N, Co, L), bf16),
            jax.ShapeDtypeStruct((N, Co, 2), f32),
        ),
        scratch_shapes=[pltpu.VMEM((3 * Co, L), bf16)],
        compiler_params=cp,
        cost_estimate=cost2,
        input_output_aliases={0: 0},   # h1's HBM buffer is reused for h2
    )(h1, ss1, w2f)

    ss2 = _fused_scale_shift(stats2, count, params["bn2_w"], params["bn2_b"],
                             gamma2, beta2)

    # ---- pass 3: fused BN2+FiLM2+SiLU -> output (NCL, length on lanes) --------
    cost3 = pl.CostEstimate(
        flops=6 * N * Co * L,
        transcendentals=N * Co * L,
        bytes_accessed=N * Co * L * 2 + N * Co * 2 * 4 + N * Co * L * xb)
    out = pl.pallas_call(
        _final_kernel,
        grid=(N,),
        in_specs=[
            pl.BlockSpec((1, Co, L), lambda n: (n, 0, 0)),
            pl.BlockSpec((1, Co, 2), lambda n: (n, 0, 0)),
        ],
        out_specs=pl.BlockSpec((1, Co, L), lambda n: (n, 0, 0)),
        out_shape=jax.ShapeDtypeStruct((N, Co, L), x_ncl.dtype),
        compiler_params=cp,
        cost_estimate=cost3,
    )(h2, ss2)

    return out


# ----------------------------- params / reference ------------------------------


def init_params(key, in_c, out_c, cond_dim):
    ks = jax.random.split(key, 8)
    return {
        "w1": 0.1 * jax.random.normal(ks[0], (out_c, in_c, 3), jnp.float32),
        "b1": 0.1 * jax.random.normal(ks[1], (out_c,), jnp.float32),
        "w2": 0.1 * jax.random.normal(ks[2], (out_c, out_c, 3), jnp.float32),
        "b2": 0.1 * jax.random.normal(ks[3], (out_c,), jnp.float32),
        "bn1_w": jnp.ones((out_c,), jnp.float32),
        "bn1_b": jnp.zeros((out_c,), jnp.float32),
        "bn2_w": jnp.ones((out_c,), jnp.float32),
        "bn2_b": jnp.zeros((out_c,), jnp.float32),
        # PyTorch Linear weight layout: (2*out_c, cond_dim)
        "f1_w": 0.1 * jax.random.normal(ks[4], (2 * out_c, cond_dim), jnp.float32),
        "f1_b": 0.1 * jax.random.normal(ks[5], (2 * out_c,), jnp.float32),
        "f2_w": 0.1 * jax.random.normal(ks[6], (2 * out_c, cond_dim), jnp.float32),
        "f2_b": 0.1 * jax.random.normal(ks[7], (2 * out_c,), jnp.float32),
    }


def _reference(x_ncl, cond, params):
    """Pure-JAX f32 reference mirroring the PyTorch training-mode forward."""
    def conv1d(h, w, b):  # h: (N, Ci, L), w: (Co, Ci, 3)
        hp = jnp.pad(h, ((0, 0), (0, 0), (1, 1)))
        y = sum(jnp.einsum("ncl,oc->nol", hp[:, :, k:k + h.shape[-1]], w[:, :, k])
                for k in range(3))
        return y + b[None, :, None]

    def bn(h, g, b):
        mean = jnp.mean(h, axis=(0, 2), keepdims=True)
        var = jnp.mean((h - mean) ** 2, axis=(0, 2), keepdims=True)
        return (h - mean) / jnp.sqrt(var + BN_EPS) * g[None, :, None] + b[None, :, None]

    def film(h, fw, fb):
        gb = _silu(cond) @ fw.T + fb
        c = h.shape[1]
        gamma, beta = gb[:, :c], gb[:, c:]
        return (1 + gamma[:, :, None]) * h + beta[:, :, None]

    h = _silu(film(bn(conv1d(x_ncl, params["w1"], params["b1"]),
                      params["bn1_w"], params["bn1_b"]),
                   params["f1_w"], params["f1_b"]))
    h = _silu(film(bn(conv1d(h, params["w2"], params["b2"]),
                      params["bn2_w"], params["bn2_b"]),
                   params["f2_w"], params["f2_b"]))
    return h


if __name__ == "__main__":
    N, IN_C, OUT_C, L, COND_DIM = 2, 4, 8, 16, 32

    key = jax.random.PRNGKey(0)
    k_x, k_c, k_p = jax.random.split(key, 3)
    x = jax.random.normal(k_x, (N, IN_C, L), jnp.float32)
    cond = jax.random.normal(k_c, (N, COND_DIM), jnp.float32)
    params = init_params(k_p, IN_C, OUT_C, COND_DIM)

    out = conv_block_forward(x, cond, params)
    out = jax.block_until_ready(out)

    ref = _reference(x, cond, params)
    assert out.shape == (N, OUT_C, L)
    # bf16 MXU operands + bf16 inter-pass activations => ~1e-2 relative budget.
    assert jnp.allclose(out, ref, atol=5e-2, rtol=5e-2), "mismatch vs JAX reference"

    print("KERNEL_OK")
</pallas_src>

<mosaic_0001>
module attributes {stable_mosaic.version = 11 : i64} {
  func.func @_conv1_kernel(%arg0: i32, %arg1: memref<1x4x16xf32, #tpu.memory_space<vmem>>, %arg2: memref<8x12xbf16, #tpu.memory_space<vmem>>, %arg3: memref<1x8x16xbf16, #tpu.memory_space<vmem>>, %arg4: memref<1x8x2xf32, #tpu.memory_space<vmem>>, %arg5: memref<12x16xbf16, #tpu.memory_space<vmem>>) attributes {dimension_semantics = [#tpu.dimension_semantics<parallel>], iteration_bounds = array<i64: 2>, scalar_prefetch = 0 : i64, scratch_operands = 1 : i64, tpu.core_type = #tpu.core_type<tc>, window_params = [{transform_indices = @transform_0, window_bounds = array<i64: 1, 4, 16>}, {pipeline_mode = #tpu.pipeline_mode<synchronous>, transform_indices = @transform_1, window_bounds = array<i64: 8, 12>}, {transform_indices = @transform_2, window_bounds = array<i64: 1, 8, 16>}, {transform_indices = @transform_3, window_bounds = array<i64: 1, 8, 2>}]} {
    %c0 = arith.constant 0 : index
    %c0_0 = arith.constant 0 : index
    %c0_1 = arith.constant 0 : index
    %0 = vector.load %arg1[%c0, %c0_0, %c0_1] : memref<1x4x16xf32, #tpu.memory_space<vmem>>, vector<1x4x16xf32>
    %1 = vector.shape_cast %0 : vector<1x4x16xf32> to vector<4x16xf32>
    %2 = arith.truncf %1 : vector<4x16xf32> to vector<4x16xbf16>
    %cst = arith.constant 0.000000e+00 : bf16
    %3 = vector.broadcast %cst : bf16 to vector<4x1xbf16>
    %4 = vector.extract_strided_slice %2 {offsets = [0, 0], sizes = [4, 15], strides = [1, 1]} : vector<4x16xbf16> to vector<4x15xbf16>
    %5 = tpu.concatenate %3, %4 in 1 : vector<4x1xbf16>, vector<4x15xbf16> -> vector<4x16xbf16>
    %6 = vector.extract_strided_slice %2 {offsets = [0, 1], sizes = [4, 15], strides = [1, 1]} : vector<4x16xbf16> to vector<4x15xbf16>
    %7 = tpu.concatenate %6, %3 in 1 : vector<4x15xbf16>, vector<4x1xbf16> -> vector<4x16xbf16>
    %8 = tpu.concatenate %5, %2, %7 in 0 : vector<4x16xbf16>, vector<4x16xbf16>, vector<4x16xbf16> -> vector<12x16xbf16>
    %c0_2 = arith.constant 0 : index
    %c0_3 = arith.constant 0 : index
    %9 = vector.load %arg5[%c0_2, %c0_3] : memref<12x16xbf16, #tpu.memory_space<vmem>>, vector<12x16xbf16>
    tpu.vector_store %arg5[%c0_2, %c0_3], %8 {strides = array<i32>} : memref<12x16xbf16, #tpu.memory_space<vmem>>, vector<12x16xbf16>,
    %c0_4 = arith.constant 0 : index
    %c0_5 = arith.constant 0 : index
    %10 = vector.load %arg2[%c0_4, %c0_5] : memref<8x12xbf16, #tpu.memory_space<vmem>>, vector<8x12xbf16>
    %c0_6 = arith.constant 0 : index
    %c0_7 = arith.constant 0 : index
    %11 = vector.load %arg5[%c0_6, %c0_7] : memref<12x16xbf16, #tpu.memory_space<vmem>>, vector<12x16xbf16>
    %cst_8 = arith.constant dense<0.000000e+00> : vector<8x16xf32>
    %12 = tpu.matmul %10, %11, %cst_8 {dimension_numbers = #tpu.dot_dimension_numbers<[1], [0], [0], [1], [0, 0, 1, 1], [], []>} : vector<8x12xbf16>, vector<12x16xbf16>, vector<8x16xf32> -> vector<8x16xf32>
    %cst_9 = arith.constant dense<0.000000e+00> : vector<8xf32>
    %13 = vector.multi_reduction <add>, %12, %cst_9 [1] : vector<8x16xf32> to vector<8xf32>
    %14 = vector.shape_cast %13 : vector<8xf32> to vector<8x1xf32>
    %15 = arith.mulf %12, %12 : vector<8x16xf32>
    %cst_10 = arith.constant dense<0.000000e+00> : vector<8xf32>
    %16 = vector.multi_reduction <add>, %15, %cst_10 [1] : vector<8x16xf32> to vector<8xf32>
    %17 = vector.shape_cast %16 : vector<8xf32> to vector<8x1xf32>
    %18 = tpu.concatenate %14, %17 in 1 : vector<8x1xf32>, vector<8x1xf32> -> vector<8x2xf32>
    %c0_11 = arith.constant 0 : index
    %c0_12 = arith.constant 0 : index
    %c0_13 = arith.constant 0 : index
    %19 = vector.load %arg4[%c0_11, %c0_12, %c0_13] : memref<1x8x2xf32, #tpu.memory_space<vmem>>, vector<1x8x2xf32>
    %20 = vector.shape_cast %19 : vector<1x8x2xf32> to vector<8x2xf32>
    %21 = vector.shape_cast %18 : vector<8x2xf32> to vector<1x8x2xf32>
    tpu.vector_store %arg4[%c0_11, %c0_12, %c0_13], %21 {strides = array<i32>} : memref<1x8x2xf32, #tpu.memory_space<vmem>>, vector<1x8x2xf32>,
    %22 = arith.truncf %12 : vector<8x16xf32> to vector<8x16xbf16>
    %c0_14 = arith.constant 0 : index
    %c0_15 = arith.constant 0 : index
    %c0_16 = arith.constant 0 : index
    %23 = vector.load %arg3[%c0_14, %c0_15, %c0_16] : memref<1x8x16xbf16, #tpu.memory_space<vmem>>, vector<1x8x16xbf16>
    %24 = vector.shape_cast %23 : vector<1x8x16xbf16> to vector<8x16xbf16>
    %25 = vector.shape_cast %22 : vector<8x16xbf16> to vector<1x8x16xbf16>
    tpu.vector_store %arg3[%c0_14, %c0_15, %c0_16], %25 {strides = array<i32>} : memref<1x8x16xbf16, #tpu.memory_space<vmem>>, vector<1x8x16xbf16>,
    return
  }
  func.func @transform_0(%arg0: i32) -> (i32, i32, i32) {
    %c0_i32 = arith.constant 0 : i32
    %c0_i32_0 = arith.constant 0 : i32
    %c0_i32_1 = arith.constant 0 : i32
    return %arg0, %c0_i32, %c0_i32_0 : i32, i32, i32
  }
  func.func @transform_1(%arg0: i32) -> (i32, i32) {
    %c0_i32 = arith.constant 0 : i32
    %c0_i32_0 = arith.constant 0 : i32
    %c0_i32_1 = arith.constant 0 : i32
    return %c0_i32, %c0_i32_0 : i32, i32
  }
  func.func @transform_2(%arg0: i32) -> (i32, i32, i32) {
    %c0_i32 = arith.constant 0 : i32
    %c0_i32_0 = arith.constant 0 : i32
    %c0_i32_1 = arith.constant 0 : i32
    return %arg0, %c0_i32, %c0_i32_0 : i32, i32, i32
  }
  func.func @transform_3(%arg0: i32) -> (i32, i32, i32) {
    %c0_i32 = arith.constant 0 : i32
    %c0_i32_0 = arith.constant 0 : i32
    %c0_i32_1 = arith.constant 0 : i32
    return %arg0, %c0_i32, %c0_i32_0 : i32, i32, i32
  }
}

module attributes {stable_mosaic.version = 11 : i64} {
  func.func @_mid_kernel(%arg0: i32, %arg1: memref<1x8x16xbf16, #tpu.memory_space<vmem>>, %arg2: memref<1x8x2xf32, #tpu.memory_space<vmem>>, %arg3: memref<8x24xbf16, #tpu.memory_space<vmem>>, %arg4: memref<1x8x16xbf16, #tpu.memory_space<vmem>>, %arg5: memref<1x8x2xf32, #tpu.memory_space<vmem>>, %arg6: memref<24x16xbf16, #tpu.memory_space<vmem>>) attributes {dimension_semantics = [#tpu.dimension_semantics<parallel>], iteration_bounds = array<i64: 2>, scalar_prefetch = 0 : i64, scratch_operands = 1 : i64, tpu.core_type = #tpu.core_type<tc>, window_params = [{transform_indices = @transform_0, window_bounds = array<i64: 1, 8, 16>}, {transform_indices = @transform_1, window_bounds = array<i64: 1, 8, 2>}, {pipeline_mode = #tpu.pipeline_mode<synchronous>, transform_indices = @transform_2, window_bounds = array<i64: 8, 24>}, {transform_indices = @transform_3, window_bounds = array<i64: 1, 8, 16>}, {transform_indices = @transform_4, window_bounds = array<i64: 1, 8, 2>}]} {
    %c0 = arith.constant 0 : index
    %c0_0 = arith.constant 0 : index
    %c0_1 = arith.constant 0 : index
    %0 = vector.load %arg2[%c0, %c0_0, %c0_1] : memref<1x8x2xf32, #tpu.memory_space<vmem>>, vector<1x8x2xf32>
    %1 = vector.shape_cast %0 : vector<1x8x2xf32> to vector<8x2xf32>
    %c0_2 = arith.constant 0 : index
    %c0_3 = arith.constant 0 : index
    %c0_4 = arith.constant 0 : index
    %2 = vector.load %arg1[%c0_2, %c0_3, %c0_4] : memref<1x8x16xbf16, #tpu.memory_space<vmem>>, vector<1x8x16xbf16>
    %3 = vector.shape_cast %2 : vector<1x8x16xbf16> to vector<8x16xbf16>
    %4 = arith.extf %3 : vector<8x16xbf16> to vector<8x16xf32>
    %5 = vector.extract_strided_slice %1 {offsets = [0, 0], sizes = [8, 1], strides = [1, 1]} : vector<8x2xf32> to vector<8x1xf32>
    %6 = vector.broadcast %5 : vector<8x1xf32> to vector<8x16xf32>
    %7 = arith.mulf %4, %6 : vector<8x16xf32>
    %8 = vector.extract_strided_slice %1 {offsets = [0, 1], sizes = [8, 1], strides = [1, 1]} : vector<8x2xf32> to vector<8x1xf32>
    %9 = vector.broadcast %8 : vector<8x1xf32> to vector<8x16xf32>
    %10 = arith.addf %7, %9 : vector<8x16xf32>
    %11 = arith.negf %10 : vector<8x16xf32>
    %12 = math.exp %11 : vector<8x16xf32>
    %cst = arith.constant 1.000000e+00 : f32
    %13 = vector.broadcast %cst : f32 to vector<8x16xf32>
    %14 = arith.addf %13, %12 : vector<8x16xf32>
    %15 = arith.divf %13, %14 : vector<8x16xf32>
    %16 = arith.mulf %10, %15 : vector<8x16xf32>
    %17 = arith.truncf %16 : vector<8x16xf32> to vector<8x16xbf16>
    %cst_5 = arith.constant 0.000000e+00 : bf16
    %18 = vector.broadcast %cst_5 : bf16 to vector<8x1xbf16>
    %19 = vector.extract_strided_slice %17 {offsets = [0, 0], sizes = [8, 15], strides = [1, 1]} : vector<8x16xbf16> to vector<8x15xbf16>
    %20 = tpu.concatenate %18, %19 in 1 : vector<8x1xbf16>, vector<8x15xbf16> -> vector<8x16xbf16>
    %21 = vector.extract_strided_slice %17 {offsets = [0, 1], sizes = [8, 15], strides = [1, 1]} : vector<8x16xbf16> to vector<8x15xbf16>
    %22 = tpu.concatenate %21, %18 in 1 : vector<8x15xbf16>, vector<8x1xbf16> -> vector<8x16xbf16>
    %23 = tpu.concatenate %20, %17, %22 in 0 : vector<8x16xbf16>, vector<8x16xbf16>, vector<8x16xbf16> -> vector<24x16xbf16>
    %c0_6 = arith.constant 0 : index
    %c0_7 = arith.constant 0 : index
    %24 = vector.load %arg6[%c0_6, %c0_7] : memref<24x16xbf16, #tpu.memory_space<vmem>>, vector<24x16xbf16>
    tpu.vector_store %arg6[%c0_6, %c0_7], %23 {strides = array<i32>} : memref<24x16xbf16, #tpu.memory_space<vmem>>, vector<24x16xbf16>,
    %c0_8 = arith.constant 0 : index
    %c0_9 = arith.constant 0 : index
    %25 = vector.load %arg3[%c0_8, %c0_9] : memref<8x24xbf16, #tpu.memory_space<vmem>>, vector<8x24xbf16>
    %c0_10 = arith.constant 0 : index
    %c0_11 = arith.constant 0 : index
    %26 = vector.load %arg6[%c0_10, %c0_11] : memref<24x16xbf16, #tpu.memory_space<vmem>>, vector<24x16xbf16>
    %cst_12 = arith.constant dense<0.000000e+00> : vector<8x16xf32>
    %27 = tpu.matmul %25, %26, %cst_12 {dimension_numbers = #tpu.dot_dimension_numbers<[1], [0], [0], [1], [0, 0, 1, 1], [], []>} : vector<8x24xbf16>, vector<24x16xbf16>, vector<8x16xf32> -> vector<8x16xf32>
    %cst_13 = arith.constant dense<0.000000e+00> : vector<8xf32>
    %28 = vector.multi_reduction <add>, %27, %cst_13 [1] : vector<8x16xf32> to vector<8xf32>
    %29 = vector.shape_cast %28 : vector<8xf32> to vector<8x1xf32>
    %30 = arith.mulf %27, %27 : vector<8x16xf32>
    %cst_14 = arith.constant dense<0.000000e+00> : vector<8xf32>
    %31 = vector.multi_reduction <add>, %30, %cst_14 [1] : vector<8x16xf32> to vector<8xf32>
    %32 = vector.shape_cast %31 : vector<8xf32> to vector<8x1xf32>
    %33 = tpu.concatenate %29, %32 in 1 : vector<8x1xf32>, vector<8x1xf32> -> vector<8x2xf32>
    %c0_15 = arith.constant 0 : index
    %c0_16 = arith.constant 0 : index
    %c0_17 = arith.constant 0 : index
    %34 = vector.load %arg5[%c0_15, %c0_16, %c0_17] : memref<1x8x2xf32, #tpu.memory_space<vmem>>, vector<1x8x2xf32>
    %35 = vector.shape_cast %34 : vector<1x8x2xf32> to vector<8x2xf32>
    %36 = vector.shape_cast %33 : vector<8x2xf32> to vector<1x8x2xf32>
    tpu.vector_store %arg5[%c0_15, %c0_16, %c0_17], %36 {strides = array<i32>} : memref<1x8x2xf32, #tpu.memory_space<vmem>>, vector<1x8x2xf32>,
    %37 = arith.truncf %27 : vector<8x16xf32> to vector<8x16xbf16>
    %c0_18 = arith.constant 0 : index
    %c0_19 = arith.constant 0 : index
    %c0_20 = arith.constant 0 : index
    %38 = vector.load %arg4[%c0_18, %c0_19, %c0_20] : memref<1x8x16xbf16, #tpu.memory_space<vmem>>, vector<1x8x16xbf16>
    %39 = vector.shape_cast %38 : vector<1x8x16xbf16> to vector<8x16xbf16>
    %40 = vector.shape_cast %37 : vector<8x16xbf16> to vector<1x8x16xbf16>
    tpu.vector_store %arg4[%c0_18, %c0_19, %c0_20], %40 {strides = array<i32>} : memref<1x8x16xbf16, #tpu.memory_space<vmem>>, vector<1x8x16xbf16>,
    return
  }
  func.func @transform_0(%arg0: i32) -> (i32, i32, i32) {
    %c0_i32 = arith.constant 0 : i32
    %c0_i32_0 = arith.constant 0 : i32
    %c0_i32_1 = arith.constant 0 : i32
    return %arg0, %c0_i32, %c0_i32_0 : i32, i32, i32
  }
  func.func @transform_1(%arg0: i32) -> (i32, i32, i32) {
    %c0_i32 = arith.constant 0 : i32
    %c0_i32_0 = arith.constant 0 : i32
    %c0_i32_1 = arith.constant 0 : i32
    return %arg0, %c0_i32, %c0_i32_0 : i32, i32, i32
  }
  func.func @transform_2(%arg0: i32) -> (i32, i32) {
    %c0_i32 = arith.constant 0 : i32
    %c0_i32_0 = arith.constant 0 : i32
    %c0_i32_1 = arith.constant 0 : i32
    return %c0_i32, %c0_i32_0 : i32, i32
  }
  func.func @transform_3(%arg0: i32) -> (i32, i32, i32) {
    %c0_i32 = arith.constant 0 : i32
    %c0_i32_0 = arith.constant 0 : i32
    %c0_i32_1 = arith.constant 0 : i32
    return %arg0, %c0_i32, %c0_i32_0 : i32, i32, i32
  }
  func.func @transform_4(%arg0: i32) -> (i32, i32, i32) {
    %c0_i32 = arith.constant 0 : i32
    %c0_i32_0 = arith.constant 0 : i32
    %c0_i32_1 = arith.constant 0 : i32
    return %arg0, %c0_i32, %c0_i32_0 : i32, i32, i32
  }
}

module attributes {stable_mosaic.version = 11 : i64} {
  func.func @_final_kernel(%arg0: i32, %arg1: memref<1x8x16xbf16, #tpu.memory_space<vmem>>, %arg2: memref<1x8x2xf32, #tpu.memory_space<vmem>>, %arg3: memref<1x8x16xf32, #tpu.memory_space<vmem>>) attributes {dimension_semantics = [#tpu.dimension_semantics<parallel>], iteration_bounds = array<i64: 2>, scalar_prefetch = 0 : i64, scratch_operands = 0 : i64, tpu.core_type = #tpu.core_type<tc>, window_params = [{transform_indices = @transform_0, window_bounds = array<i64: 1, 8, 16>}, {transform_indices = @transform_1, window_bounds = array<i64: 1, 8, 2>}, {transform_indices = @transform_2, window_bounds = array<i64: 1, 8, 16>}]} {
    %c0 = arith.constant 0 : index
    %c0_0 = arith.constant 0 : index
    %c0_1 = arith.constant 0 : index
    %0 = vector.load %arg2[%c0, %c0_0, %c0_1] : memref<1x8x2xf32, #tpu.memory_space<vmem>>, vector<1x8x2xf32>
    %1 = vector.shape_cast %0 : vector<1x8x2xf32> to vector<8x2xf32>
    %c0_2 = arith.constant 0 : index
    %c0_3 = arith.constant 0 : index
    %c0_4 = arith.constant 0 : index
    %2 = vector.load %arg1[%c0_2, %c0_3, %c0_4] : memref<1x8x16xbf16, #tpu.memory_space<vmem>>, vector<1x8x16xbf16>
    %3 = vector.shape_cast %2 : vector<1x8x16xbf16> to vector<8x16xbf16>
    %4 = arith.extf %3 : vector<8x16xbf16> to vector<8x16xf32>
    %5 = vector.extract_strided_slice %1 {offsets = [0, 0], sizes = [8, 1], strides = [1, 1]} : vector<8x2xf32> to vector<8x1xf32>
    %6 = vector.broadcast %5 : vector<8x1xf32> to vector<8x16xf32>
    %7 = arith.mulf %4, %6 : vector<8x16xf32>
    %8 = vector.extract_strided_slice %1 {offsets = [0, 1], sizes = [8, 1], strides = [1, 1]} : vector<8x2xf32> to vector<8x1xf32>
    %9 = vector.broadcast %8 : vector<8x1xf32> to vector<8x16xf32>
    %10 = arith.addf %7, %9 : vector<8x16xf32>
    %11 = arith.negf %10 : vector<8x16xf32>
    %12 = math.exp %11 : vector<8x16xf32>
    %cst = arith.constant 1.000000e+00 : f32
    %13 = vector.broadcast %cst : f32 to vector<8x16xf32>
    %14 = arith.addf %13, %12 : vector<8x16xf32>
    %15 = arith.divf %13, %14 : vector<8x16xf32>
    %16 = arith.mulf %10, %15 : vector<8x16xf32>
    %c0_5 = arith.constant 0 : index
    %c0_6 = arith.constant 0 : index
    %c0_7 = arith.constant 0 : index
    %17 = vector.load %arg3[%c0_5, %c0_6, %c0_7] : memref<1x8x16xf32, #tpu.memory_space<vmem>>, vector<1x8x16xf32>
    %18 = vector.shape_cast %17 : vector<1x8x16xf32> to vector<8x16xf32>
    %19 = vector.shape_cast %16 : vector<8x16xf32> to vector<1x8x16xf32>
    tpu.vector_store %arg3[%c0_5, %c0_6, %c0_7], %19 {strides = array<i32>} : memref<1x8x16xf32, #tpu.memory_space<vmem>>, vector<1x8x16xf32>,
    return
  }
  func.func @transform_0(%arg0: i32) -> (i32, i32, i32) {
    %c0_i32 = arith.constant 0 : i32
    %c0_i32_0 = arith.constant 0 : i32
    %c0_i32_1 = arith.constant 0 : i32
    return %arg0, %c0_i32, %c0_i32_0 : i32, i32, i32
  }
  func.func @transform_1(%arg0: i32) -> (i32, i32, i32) {
    %c0_i32 = arith.constant 0 : i32
    %c0_i32_0 = arith.constant 0 : i32
    %c0_i32_1 = arith.constant 0 : i32
    return %arg0, %c0_i32, %c0_i32_0 : i32, i32, i32
  }
  func.func @transform_2(%arg0: i32) -> (i32, i32, i32) {
    %c0_i32 = arith.constant 0 : i32
    %c0_i32_0 = arith.constant 0 : i32
    %c0_i32_1 = arith.constant 0 : i32
    return %arg0, %c0_i32, %c0_i32_0 : i32, i32, i32
  }
}

</mosaic_0001>

<llo_original>
// kernel: conv_block_forward.3
$region0: #{conv_block_forward.3}
  #allocation0 [shape = 'u32[]', space=smem, size = 0x4, offset = 0x4, fixed_abs, tag = 'smem constant byte address 0x4 - core index']
  #allocation1 [shape = 'u32[72,128]{1,0:T(1,128)}', space=vmem, size = 0x9000, scoped, tag = 'internal scratch']
  #allocation2 [shape = 'bf16[12,16]{1,0:T(8,128)(2,1)}', space=vmem, size = 0x1000, scoped, tag = 'scratch operand']
  %s0 = inlined_call_operand.vmem [shape: f32[2,4,16], index: 0, kind: input, shape index: {}]
  %s1 = inlined_call_operand.vmem [shape: bf16[8,12], index: 1, kind: input, shape index: {}]
  %s2 = inlined_call_operand.vmem [shape: bf16[2,8,16], index: 2, kind: output, shape index: {0}]
  %s3 = inlined_call_operand.vmem [shape: f32[2,8,2], index: 3, kind: output, shape index: {1}]
  %4 = xla_tuple %s2, %s3
  %s5 = sld [smem:[#allocation0]]
  $region49: #{conv_block_forward.3} parent=0
    _
  %s7 = ssub.s32 1, %s5
  %s8 = scalar_select 0, %s7, %s5
  loop: start=0, step=1, limit=4
  $region2: #{conv_block_forward.3} parent=0 // loop_pre_header
    _
  $region3: #{conv_block_forward.3} parent=0 // loop_header
    %s10 = sphi 0, %s14
    %p11 = scmp.ge.s32.totalorder %s10, 4
    %s20 = sphi 0, %s22
    %s23 = sphi 0, %s20
    %s24 = sphi 0, %s23
    %s40 = sphi 0, %s24
    %s44 = sphi 0, %s44
    %s46 = sphi 0, %s44
    %s47 = sphi 0, %s46
    %s61 = sphi 0, %s47
    %s67 = sphi 0, %s69
    %s70 = sphi 0, %s67
    %s71 = sphi 0, %s70
    %s87 = sphi 0, %s71
    %s93 = sphi 0, %s95
    %s96 = sphi 0, %s93
    %s97 = sphi 0, %s96
    %s113 = sphi 0, %s97
  $region4: #{conv_block_forward.3} parent=0 // loop_header_branch
    %13 = sbr.rel (%p11) target = $region8
  $region5: #{conv_block_forward.3} parent=0 // loop_body
    %s15 = ssub.s32 %s10, 1
    %s16 = ssub.s32 %s10, 2
    %s17 = sadd.s32 %s10, 1
    %s18 = ssub.s32 %s10, %s17
    %p19 = scmp.eq.s32.totalorder %s18, 0
    %s21 = sadd.s32 %s20, 1
    %s22 = scalar_select %p19, %s20, %s21
    %p25 = pneg %p19
    %p26 = scmp.eq.s32.totalorder %s10, 1
    %p27 = por %p25, %p26
    %p28 = scmp.ne.s32.totalorder %s20, %s23
    %p29 = scmp.eq.s32.totalorder %s10, 0
    %p30 = por %p28, %p29
    %p31 = scmp.ne.s32.totalorder %s20, %s23
    %p32 = scmp.eq.s32.totalorder %s15, 1
    %p33 = por %p31, %p32
    %p34 = scmp.ne.s32.totalorder %s23, %s24
    %p35 = scmp.eq.s32.totalorder %s15, 0
    %p36 = por %p34, %p35
    %p37 = scmp.ne.s32.totalorder %s23, %s24
    %p38 = scmp.eq.s32.totalorder %s16, 1
    %p39 = por %p37, %p38
    %p41 = scmp.ne.s32.totalorder %s24, %s40
    %p42 = scmp.eq.s32.totalorder %s16, 0
    %p43 = por %p41, %p42
    %s45 = sadd.s32 %s44, 1
    %p48 = scmp.eq.s32.totalorder %s10, 1
    %p49 = scmp.ne.s32.totalorder %s44, %s46
    %p50 = scmp.eq.s32.totalorder %s10, 0
    %p51 = por %p49, %p50
    %p52 = scmp.ne.s32.totalorder %s44, %s46
    %p53 = scmp.eq.s32.totalorder %s15, 1
    %p54 = por %p52, %p53
    %p55 = scmp.ne.s32.totalorder %s46, %s47
    %p56 = scmp.eq.s32.totalorder %s15, 0
    %p57 = por %p55, %p56
    %p58 = scmp.ne.s32.totalorder %s46, %s47
    %p59 = scmp.eq.s32.totalorder %s16, 1
    %p60 = por %p58, %p59
    %p62 = scmp.ne.s32.totalorder %s47, %s61
    %p63 = scmp.eq.s32.totalorder %s16, 0
    %p64 = por %p62, %p63
    %s65 = ssub.s32 %s10, %s17
    %p66 = scmp.eq.s32.totalorder %s65, 0
    %s68 = sadd.s32 %s67, 1
    %s69 = scalar_select %p66, %s67, %s68
    %p72 = pneg %p66
    %p73 = scmp.eq.s32.totalorder %s10, 1
    %p74 = por %p72, %p73
    %p75 = scmp.ne.s32.totalorder %s67, %s70
    %p76 = scmp.eq.s32.totalorder %s10, 0
    %p77 = por %p75, %p76
    %p78 = scmp.ne.s32.totalorder %s67, %s70
    %p79 = scmp.eq.s32.totalorder %s15, 1
    %p80 = por %p78, %p79
    %p81 = scmp.ne.s32.totalorder %s70, %s71
    %p82 = scmp.eq.s32.totalorder %s15, 0
    %p83 = por %p81, %p82
    %p84 = scmp.ne.s32.totalorder %s70, %s71
    %p85 = scmp.eq.s32.totalorder %s16, 1
    %p86 = por %p84, %p85
    %p88 = scmp.ne.s32.totalorder %s71, %s87
    %p89 = scmp.eq.s32.totalorder %s16, 0
    %p90 = por %p88, %p89
    %s91 = ssub.s32 %s10, %s17
    %p92 = scmp.eq.s32.totalorder %s91, 0
    %s94 = sadd.s32 %s93, 1
    %s95 = scalar_select %p92, %s93, %s94
    %p98 = pneg %p92
    %p99 = scmp.eq.s32.totalorder %s10, 1
    %p100 = por %p98, %p99
    %p101 = scmp.ne.s32.totalorder %s93, %s96
    %p102 = scmp.eq.s32.totalorder %s10, 0
    %p103 = por %p101, %p102
    %p104 = scmp.ne.s32.totalorder %s93, %s96
    %p105 = scmp.eq.s32.totalorder %s15, 1
    %p106 = por %p104, %p105
    %p107 = scmp.ne.s32.totalorder %s96, %s97
    %p108 = scmp.eq.s32.totalorder %s15, 0
    %p109 = por %p107, %p108
    %p110 = scmp.ne.s32.totalorder %s96, %s97
    %p111 = scmp.eq.s32.totalorder %s16, 1
    %p112 = por %p110, %p111
    %p114 = scmp.ne.s32.totalorder %s97, %s113
    %p115 = scmp.eq.s32.totalorder %s16, 0
    %p116 = por %p114, %p115
    %p117 = scmp.le.s32.totalorder 1, %s10
    %p118 = scmp.lt.s32.totalorder %s10, 3
    %p119 = pnand %p117, %p118
    %p120 = pneg %p119
    // Predicated region
    $region9: #{conv_block_forward.3} parent=5 // pred_check
      _
    $region10: #{conv_block_forward.3} parent=5 // pred_check_branch
      %122 = sbr.rel (%p119) target = $region12
    $region11: #{conv_block_forward.3} parent=5 // pred_region
      %s123 = ssub.s32 %s10, 1
      // Predicated region
      $region13: #{conv_block_forward.3} parent=11 // pred_check
        %p124 = pneg %p57
      $region14: #{conv_block_forward.3} parent=11 // pred_check_branch
        %126 = sbr.rel (%p124) target = $region16
      $region15: #{conv_block_forward.3} parent=11 // pred_region
        _
      $region16: #{conv_block_forward.3} parent=11 // pred_fallthru
        _
    $region12: #{conv_block_forward.3} parent=5 // pred_fallthru
      _
    %p127 = scmp.lt.s32.totalorder %s10, 2
    // Predicated region
    $region17: #{conv_block_forward.3} parent=5 // pred_check
      %p128 = pneg %p127
    $region18: #{conv_block_forward.3} parent=5 // pred_check_branch
      %130 = sbr.rel (%p128) target = $region20
    $region19: #{conv_block_forward.3} parent=5 // pred_region
      // Predicated region
      $region21: #{conv_block_forward.3} parent=19 // pred_check
        %p131 = pneg %p30
      $region22: #{conv_block_forward.3} parent=19 // pred_check_branch
        %133 = sbr.rel (%p131) target = $region24
      $region23: #{conv_block_forward.3} parent=19 // pred_region
        %p134 = scmp.lt.s32.totalorder %s10, 1
        %s135 = scalar_select %p134, %s10, 1
        %s136 = smul.addr %s135, 4
        %s137 = scalar_lea.vmem %s0, %s136
      $region24: #{conv_block_forward.3} parent=19 // pred_fallthru
        _
    $region20: #{conv_block_forward.3} parent=5 // pred_fallthru
      _
    %p138 = scmp.le.s32.totalorder 1, %s10
    %p139 = scmp.lt.s32.totalorder %s10, 3
    %p140 = pnand %p138, %p139
    %p141 = pneg %p140
    // Predicated region
    $region25: #{conv_block_forward.3} parent=5 // pred_check
      _
    $region26: #{conv_block_forward.3} parent=5 // pred_check_branch
      %143 = sbr.rel (%p140) target = $region28
    $region27: #{conv_block_forward.3} parent=5 // pred_region
      %s144 = ssub.s32 %s10, 1
      %p145 = scmp.lt.s32.totalorder %s15, 1
      %s146 = scalar_select %p145, %s15, 1
      %s147 = smul.addr %s146, 4
      %s148 = scalar_lea.vmem %s0, %s147
      %p149 = pneg %p36
      %p150 = pneg %p33
      %p151 = pneg %p57
      %p152 = pneg %p54
      %p153 = pneg %p83
      %p154 = pneg %p80
      %p155 = scmp.lt.s32.totalorder %s15, 1
      %s156 = scalar_select %p155, %s15, 1
      %s157 = smul.addr %s156, 4
      %s158 = scalar_lea.vmem %s2, %s157
      %p159 = pneg %p109
      %p160 = pneg %p106
      %p161 = scmp.lt.s32.totalorder %s15, 1
      %s162 = scalar_select %p161, %s15, 1
      %s163 = smul.addr %s162, 8
      %s164 = scalar_lea.vmem %s3, %s163
      %p165 = scmp.lt.s32.totalorder %s15, 1
      %s166 = scalar_select %p165, %s15, 1
      %s167 = smul.addr %s166, 4
      %s168 = scalar_lea.vmem %s0, %s167
      %p169 = scmp.lt.s32.totalorder %s15, 1
      %s170 = scalar_select %p169, %s15, 1
      %s171 = smul.addr %s170, 4
      %s172 = scalar_lea.vmem %s2, %s171
      %p173 = scmp.lt.s32.totalorder %s15, 1
      %s174 = scalar_select %p173, %s15, 1
      %s175 = smul.addr %s174, 8
      %s176 = scalar_lea.vmem %s3, %s175
      %v178 = vld [vmem:[%s168] sm:$0xf]
      %v179 = vpack.c.bf16 %v178, %v178
      %v181 = vunpack.c.l.b16 %v179
      %v182 = vpack.c.b16 %v181, %v181
      %183 = vrot.lane.b32.xlu0 %v182, 1
      %v184 = vpop.permute.xlu0 %183
      %vm185 = vcmask 7168
      %v188 = vsel %vm185, 0, %v184
      %189 = vrot.lane.b32.xlu0 %v182, 127
      %v190 = vpop.permute.xlu0 %189
      %vm191 = vcmask 121856
      %v193 = vsel %vm191, %v190, 0
      %v194 = vrot.slane %v182, 6
      %v196 = vrot.slane %v193, 4
      %vm197 = vcmask 1041408
      %v199 = vsel %vm197, %v188, %v194
      %vm200 = vcmask 1043456
      %v202 = vsel %vm200, %v199, %v196
      %v204 = vunpack.c.l.b16 %v202
      %v205 = vunpack.c.h.b16 %v202
      %v206 = vpack.c.b16 %v204, %v204
      %v207 = vpack.c.b16 %v205, %v205
      %vm210 = vcmask 125952
      %211 = vst.msk [vmem:[#allocation2] sm:$0xf] %vm210, %v206
      %vm212 = vcmask 123904
      %213 = vst.msk [vmem:[#allocation2 + $0x4] sm:$0x3] %vm212, %v207
      %v214 = vld [vmem:[%s1] sm:$0xf]
      %v215 = vld [vmem:[#allocation2] sm:$0xf]
      %v216 = vld [vmem:[#allocation2 + $0x4] sm:$0x3]
      %v219 = vunpack.c.l.b16 %v215
      %v220 = vunpack.c.l.b16 %v216
      %v221 = vpack.c.b16 %v220, %v219
      %vm222 = vcmask 97280
      %v224 = vsel %vm222, %v214, 0
      %vm226 = vcmask 1045504
      %v228 = vsel %vm226, %v221, 0
      %230 = vmatpush.bf16.msra.mxu0 0
      %231 = vmatpush.bf16.msra.mxu0 0
      %232 = vmatpush.bf16.msra.mxu0 0
      %233 = vmatpush.bf16.msra.mxu0 0
      %234 = vmatpush.bf16.msra.mxu0 0
      %235 = vmatpush.bf16.msra.mxu0 0
      %236 = vmatpush.bf16.msra.mxu0 0
      %237 = vmatpush.bf16.msra.mxu0 %v228
      %238 = vmatmul.bf16.gmra.mxu0 %v224
      %v239 = vpop.f32.mrf.mxu0
      %v240 = vadd.f32 0.0, %v239
      %v241 = vpop.f32.mrf.mxu0
      %242 = vdwg.mxu0
      %vm243 = vcmask 130048
      %v244 = vsel %vm243, %v240, 0.0
      %245 = vadd.xlane.f32.xlu0 %v244
      %v246 = vpop.xlane.xlu0 %245
      %v247 = vmul.f32 %v240, %v240
      %v248 = vsel %vm243, %v247, 0.0
      %249 = vadd.xlane.f32.xlu0 %v248
      %v250 = vpop.xlane.xlu0 %249
      %v251 = vsel %vm185, %v246, %v250
      %vm252 = vcmask 15360
      %253 = vst.msk [vmem:[%s176] sm:$0xff] %vm252, %v251
      %v254 = vpack.c.bf16 %v240, %v240
      %255 = vst.msk [vmem:[%s172] sm:$0xf] %vm210, %v254
      %p256 = scmp.lt.s32.totalorder %s15, 1
      %s257 = scalar_select %p256, %s15, 1
      %s258 = smul.addr %s257, 4
      %s259 = scalar_lea.vmem %s2, %s258
      %p260 = scmp.lt.s32.totalorder %s15, 1
      %s261 = scalar_select %p260, %s15, 1
      %s262 = smul.addr %s261, 8
      %s263 = scalar_lea.vmem %s3, %s262
      // Predicated region
      $region29: #{conv_block_forward.3} parent=27 // pred_check
        %p264 = pneg %p80
      $region30: #{conv_block_forward.3} parent=27 // pred_check_branch
        %266 = sbr.rel (%p264) target = $region32
      $region31: #{conv_block_forward.3} parent=27 // pred_region
        _
      $region32: #{conv_block_forward.3} parent=27 // pred_fallthru
        _
      // Predicated region
      $region33: #{conv_block_forward.3} parent=27 // pred_check
        %p267 = pneg %p106
      $region34: #{conv_block_forward.3} parent=27 // pred_check_branch
        %269 = sbr.rel (%p267) target = $region36
      $region35: #{conv_block_forward.3} parent=27 // pred_region
        _
      $region36: #{conv_block_forward.3} parent=27 // pred_fallthru
        _
    $region28: #{conv_block_forward.3} parent=5 // pred_fallthru
      _
    %p270 = scmp.le.s32.totalorder 2, %s10
    // Predicated region
    $region37: #{conv_block_forward.3} parent=5 // pred_check
      %p271 = pneg %p270
    $region38: #{conv_block_forward.3} parent=5 // pred_check_branch
      %273 = sbr.rel (%p271) target = $region40
    $region39: #{conv_block_forward.3} parent=5 // pred_region
      %s274 = ssub.s32 %s10, 2
      // Predicated region
      $region41: #{conv_block_forward.3} parent=39 // pred_check
        %p275 = pneg %p86
      $region42: #{conv_block_forward.3} parent=39 // pred_check_branch
        %277 = sbr.rel (%p275) target = $region44
      $region43: #{conv_block_forward.3} parent=39 // pred_region
        %p278 = scmp.lt.s32.totalorder %s16, 1
        %s279 = scalar_select %p278, %s16, 1
        %s280 = smul.addr %s279, 4
        %s281 = scalar_lea.vmem %s2, %s280
      $region44: #{conv_block_forward.3} parent=39 // pred_fallthru
        _
      // Predicated region
      $region45: #{conv_block_forward.3} parent=39 // pred_check
        %p282 = pneg %p112
      $region46: #{conv_block_forward.3} parent=39 // pred_check_branch
        %284 = sbr.rel (%p282) target = $region48
      $region47: #{conv_block_forward.3} parent=39 // pred_region
        %p285 = scmp.lt.s32.totalorder %s16, 1
        %s286 = scalar_select %p285, %s16, 1
        %s287 = smul.addr %s286, 8
        %s288 = scalar_lea.vmem %s3, %s287
      $region48: #{conv_block_forward.3} parent=39 // pred_fallthru
        _
    $region40: #{conv_block_forward.3} parent=5 // pred_fallthru
      _
  $region6: #{conv_block_forward.3} parent=0 // loop_footer
    %s14 = sadd.s32 1, %s10
  $region7: #{conv_block_forward.3} parent=0 // loop_footer_branch
    %9 = sbr.rel target = $region3
  $region8: #{conv_block_forward.3} parent=0 // loop_exit
    _

// kernel: conv_block_forward.5
$region0: #{conv_block_forward.5}
  #allocation0 [shape = 'u32[]', space=smem, size = 0x4, offset = 0x4, fixed_abs, tag = 'smem constant byte address 0x4 - core index']
  #allocation1 [shape = 'u32[72,128]{1,0:T(1,128)}', space=vmem, size = 0x9000, scoped, tag = 'internal scratch']
  %s0 = inlined_call_operand.vmem [shape: bf16[2,8,16], index: 0, kind: input, shape index: {}]
  %s1 = inlined_call_operand.vmem [shape: f32[2,8,2], index: 1, kind: input, shape index: {}]
  %s2 = inlined_call_operand.hbm [shape: f32[2,8,16], index: 2, kind: output, shape index: {}]
  %s3 = sld [smem:[#allocation0]]
  $region41: #{conv_block_forward.5} parent=0
    _
  %s5 = ssub.s32 1, %s3
  %s6 = scalar_select 0, %s5, %s3
  $region1: #{conv_block_forward.5} parent=0
    #allocation2 [shape = 'u8[8192]{0}', space=vmem, size = 0x2000, scoped, tag = 'output window, operand 0']
    #allocation3 [shape = 's32[2]{0}', space=sflag, size = 0x8, scoped, tag = 'scoped memory for conv_block_forward.5']
    %7 = vsyncpa [#allocation3], 0
    %s8 = scalar_lea.sflag [#allocation3], 1
    %9 = vsyncpa %s8, 0
    loop: start=0, step=1, limit=4
    $region2: #{conv_block_forward.5} parent=1 // loop_pre_header
      _
    $region3: #{conv_block_forward.5} parent=1 // loop_header
      %s11 = sphi 0, %s15
      %p12 = scmp.ge.s32.totalorder %s11, 4
      %s21 = sphi 0, %s23
      %s24 = sphi 0, %s21
      %s25 = sphi 0, %s24
      %s41 = sphi 0, %s25
      %s47 = sphi 0, %s49
      %s50 = sphi 0, %s47
      %s51 = sphi 0, %s50
      %s67 = sphi 0, %s51
      %s73 = sphi 0, %s75
      %s76 = sphi 0, %s73
      %s77 = sphi 0, %s76
      %s93 = sphi 0, %s77
    $region4: #{conv_block_forward.5} parent=1 // loop_header_branch
      %14 = sbr.rel (%p12) target = $region8
    $region5: #{conv_block_forward.5} parent=1 // loop_body
      %s16 = ssub.s32 %s11, 1
      %s17 = ssub.s32 %s11, 2
      %s18 = sadd.s32 %s11, 1
      %s19 = ssub.s32 %s11, %s18
      %p20 = scmp.eq.s32.totalorder %s19, 0
      %s22 = sadd.s32 %s21, 1
      %s23 = scalar_select %p20, %s21, %s22
      %p26 = pneg %p20
      %p27 = scmp.eq.s32.totalorder %s11, 1
      %p28 = por %p26, %p27
      %p29 = scmp.ne.s32.totalorder %s21, %s24
      %p30 = scmp.eq.s32.totalorder %s11, 0
      %p31 = por %p29, %p30
      %p32 = scmp.ne.s32.totalorder %s21, %s24
      %p33 = scmp.eq.s32.totalorder %s16, 1
      %p34 = por %p32, %p33
      %p35 = scmp.ne.s32.totalorder %s24, %s25
      %p36 = scmp.eq.s32.totalorder %s16, 0
      %p37 = por %p35, %p36
      %p38 = scmp.ne.s32.totalorder %s24, %s25
      %p39 = scmp.eq.s32.totalorder %s17, 1
      %p40 = por %p38, %p39
      %p42 = scmp.ne.s32.totalorder %s25, %s41
      %p43 = scmp.eq.s32.totalorder %s17, 0
      %p44 = por %p42, %p43
      %s45 = ssub.s32 %s11, %s18
      %p46 = scmp.eq.s32.totalorder %s45, 0
      %s48 = sadd.s32 %s47, 1
      %s49 = scalar_select %p46, %s47, %s48
      %p52 = pneg %p46
      %p53 = scmp.eq.s32.totalorder %s11, 1
      %p54 = por %p52, %p53
      %p55 = scmp.ne.s32.totalorder %s47, %s50
      %p56 = scmp.eq.s32.totalorder %s11, 0
      %p57 = por %p55, %p56
      %p58 = scmp.ne.s32.totalorder %s47, %s50
      %p59 = scmp.eq.s32.totalorder %s16, 1
      %p60 = por %p58, %p59
      %p61 = scmp.ne.s32.totalorder %s50, %s51
      %p62 = scmp.eq.s32.totalorder %s16, 0
      %p63 = por %p61, %p62
      %p64 = scmp.ne.s32.totalorder %s50, %s51
      %p65 = scmp.eq.s32.totalorder %s17, 1
      %p66 = por %p64, %p65
      %p68 = scmp.ne.s32.totalorder %s51, %s67
      %p69 = scmp.eq.s32.totalorder %s17, 0
      %p70 = por %p68, %p69
      %s71 = ssub.s32 %s11, %s18
      %p72 = scmp.eq.s32.totalorder %s71, 0
      %s74 = sadd.s32 %s73, 1
      %s75 = scalar_select %p72, %s73, %s74
      %p78 = pneg %p72
      %p79 = scmp.eq.s32.totalorder %s11, 1
      %p80 = por %p78, %p79
      %p81 = scmp.ne.s32.totalorder %s73, %s76
      %p82 = scmp.eq.s32.totalorder %s11, 0
      %p83 = por %p81, %p82
      %p84 = scmp.ne.s32.totalorder %s73, %s76
      %p85 = scmp.eq.s32.totalorder %s16, 1
      %p86 = por %p84, %p85
      %p87 = scmp.ne.s32.totalorder %s76, %s77
      %p88 = scmp.eq.s32.totalorder %s16, 0
      %p89 = por %p87, %p88
      %p90 = scmp.ne.s32.totalorder %s76, %s77
      %p91 = scmp.eq.s32.totalorder %s17, 1
      %p92 = por %p90, %p91
      %p94 = scmp.ne.s32.totalorder %s77, %s93
      %p95 = scmp.eq.s32.totalorder %s17, 0
      %p96 = por %p94, %p95
      %p97 = scmp.le.s32.totalorder 1, %s11
      %p98 = scmp.lt.s32.totalorder %s11, 3
      %p99 = pnand %p97, %p98
      %p100 = pneg %p99
      // Predicated region
      $region9: #{conv_block_forward.5} parent=5 // pred_check
        _
      $region10: #{conv_block_forward.5} parent=5 // pred_check_branch
        %102 = sbr.rel (%p99) target = $region12
      $region11: #{conv_block_forward.5} parent=5 // pred_region
        %s103 = ssub.s32 %s11, 1
      $region12: #{conv_block_forward.5} parent=5 // pred_fallthru
        _
      %p104 = scmp.lt.s32.totalorder %s11, 2
      // Predicated region
      $region13: #{conv_block_forward.5} parent=5 // pred_check
        %p105 = pneg %p104
      $region14: #{conv_block_forward.5} parent=5 // pred_check_branch
        %107 = sbr.rel (%p105) target = $region16
      $region15: #{conv_block_forward.5} parent=5 // pred_region
        // Predicated region
        $region17: #{conv_block_forward.5} parent=15 // pred_check
          %p108 = pneg %p31
        $region18: #{conv_block_forward.5} parent=15 // pred_check_branch
          %110 = sbr.rel (%p108) target = $region20
        $region19: #{conv_block_forward.5} parent=15 // pred_region
          %p111 = scmp.lt.s32.totalorder %s11, 1
          %s112 = scalar_select %p111, %s11, 1
          %s113 = smul.addr %s112, 4
          %s114 = scalar_lea.vmem %s0, %s113
        $region20: #{conv_block_forward.5} parent=15 // pred_fallthru
          _
        // Predicated region
        $region21: #{conv_block_forward.5} parent=15 // pred_check
          %p115 = pneg %p57
        $region22: #{conv_block_forward.5} parent=15 // pred_check_branch
          %117 = sbr.rel (%p115) target = $region24
        $region23: #{conv_block_forward.5} parent=15 // pred_region
          %p118 = scmp.lt.s32.totalorder %s11, 1
          %s119 = scalar_select %p118, %s11, 1
          %s120 = smul.addr %s119, 8
          %s121 = scalar_lea.vmem %s1, %s120
        $region24: #{conv_block_forward.5} parent=15 // pred_fallthru
          _
      $region16: #{conv_block_forward.5} parent=5 // pred_fallthru
        _
      %p122 = scmp.le.s32.totalorder 1, %s11
      %p123 = scmp.lt.s32.totalorder %s11, 3
      %p124 = pnand %p122, %p123
      %p125 = pneg %p124
      // Predicated region
      $region25: #{conv_block_forward.5} parent=5 // pred_check
        _
      $region26: #{conv_block_forward.5} parent=5 // pred_check_branch
        %127 = sbr.rel (%p124) target = $region28
      $region27: #{conv_block_forward.5} parent=5 // pred_region
        %s128 = ssub.s32 %s11, 1
        %p129 = scmp.lt.s32.totalorder %s16, 1
        %s130 = scalar_select %p129, %s16, 1
        %s131 = smul.addr %s130, 4
        %s132 = scalar_lea.vmem %s0, %s131
        %p133 = pneg %p37
        %p134 = pneg %p34
        %p135 = scmp.lt.s32.totalorder %s16, 1
        %s136 = scalar_select %p135, %s16, 1
        %s137 = smul.addr %s136, 8
        %s138 = scalar_lea.vmem %s1, %s137
        %p139 = pneg %p63
        %p140 = pneg %p60
        %p141 = pneg %p89
        %p142 = pneg %p86
        %s143 = sand.u32 %s76, 1
        %s144 = scalar_lea.sflag [#allocation3], %s143
        %s145 = sand.u32 %s76, 1
        %s146 = smul.addr %s145, 8
        %s147 = scalar_lea.vmem [#allocation2], %s146
        %p148 = scmp.lt.s32.totalorder %s16, 1
        %s149 = scalar_select %p148, %s16, 1
        %s150 = smul.addr %s149, 4
        %s151 = scalar_lea.vmem %s0, %s150
        %p152 = scmp.lt.s32.totalorder %s16, 1
        %s153 = scalar_select %p152, %s16, 1
        %s154 = smul.addr %s153, 8
        %s155 = scalar_lea.vmem %s1, %s154
        %v156 = vld [vmem:[%s155] sm:$0xff]
        %v157 = vld [vmem:[%s151] sm:$0xf]
        %v158 = vunpack.c.l.bf16 %v157
        %160 = vset.pattern.permute.xlu0 0
        %161 = vperm.xlu0 %160, %v156
        %v162 = vpop.permute.xlu0 %161
        %v164 = vmul.f32 %v158, %v162
        %165 = vset.pattern.permute.xlu0 1
        %166 = vperm.xlu0 %165, %v156
        %v167 = vpop.permute.xlu0 %166
        %v169 = vadd.f32 %v164, %v167
        %v170 = vxor.u32 %v169, 2147483648
        %v171 = vmul.f32 %v170, 1.442695
        %v172 = vpow.pop %v171
        %v173 = vadd.f32 %v172, 1.0
        %v174 = vrcp.pop %v173
        %v175 = vmul.f32 %v173, %v174
        %v176 = vsub.f32 1.0, %v175
        %v177 = vmul.f32 %v174, %v176
        %v178 = vadd.f32 %v174, %v177
        %vm179 = vweird.f32 %v173
        %vm180 = vweird.f32 %v174
        %vm181 = vmor %vm179, %vm180
        %v182 = vsel %vm181, %v174, %v178
        %v183 = vand.u32 2147483647, %v173
        %vm184 = vcmp.eq.f32.partialorder %v183, 8.507059e+37
        %v185 = vand.u32 %v173, 2147483648
        %v186 = vor.u32 1.1754944e-38, %v185
        %v187 = vsel %vm184, %v186, %v182
        %v188 = vmul.f32 1.0, %v187
        %v189 = vmul.f32 %v169, %v188
        %vm190 = vcmask 130048
        %191 = vst.msk [vmem:[%s147] sm:$0xff] %vm190, %v189
        %s192 = sand.u32 %s76, 1
        %s193 = scalar_lea.sflag [#allocation3], %s192
        %s194 = sand.u32 %s76, 1
        %s195 = smul.addr %s194, 8
        %s196 = scalar_lea.vmem [#allocation2], %s195
        // Predicated region
        $region29: #{conv_block_forward.5} parent=27 // pred_check
          %p197 = pneg %p86
        $region30: #{conv_block_forward.5} parent=27 // pred_check_branch
          %199 = sbr.rel (%p197) target = $region32
        $region31: #{conv_block_forward.5} parent=27 // pred_region
          %201 = vsyncadd %s193, 0
          %s202 = smul.addr %s16, 8
          %s203 = scalar_lea.hbm %s2, %s202
          %s205 = sshll.u32 %s196, 4
          %s206 = int_to_ptr.vmem [resolvable:$true] %s205
          %s207 = sshll.u32 %s203, 4
          %s208 = int_to_ptr.hbm [resolvable:$true] %s207
          %210 = dma.vmem_to_hbm [thread:$0]  %s206, 128, %s208, %s193
        $region32: #{conv_block_forward.5} parent=27 // pred_fallthru
          _
      $region28: #{conv_block_forward.5} parent=5 // pred_fallthru
        _
      %p211 = scmp.le.s32.totalorder 2, %s11
      // Predicated region
      $region33: #{conv_block_forward.5} parent=5 // pred_check
        %p212 = pneg %p211
      $region34: #{conv_block_forward.5} parent=5 // pred_check_branch
        %214 = sbr.rel (%p212) target = $region36
      $region35: #{conv_block_forward.5} parent=5 // pred_region
        %s215 = ssub.s32 %s11, 2
        // Predicated region
        $region37: #{conv_block_forward.5} parent=35 // pred_check
          %p216 = pneg %p92
        $region38: #{conv_block_forward.5} parent=35 // pred_check_branch
          %218 = sbr.rel (%p216) target = $region40
        $region39: #{conv_block_forward.5} parent=35 // pred_region
          %s219 = sand.u32 %s77, 1
          %s220 = scalar_lea.sflag [#allocation3], %s219
          %s221 = sand.u32 %s77, 1
          %s222 = smul.addr %s221, 8
          %s223 = scalar_lea.vmem [#allocation2], %s222
          %225 = dma.done %s220, 128
        $region40: #{conv_block_forward.5} parent=35 // pred_fallthru
          _
      $region36: #{conv_block_forward.5} parent=5 // pred_fallthru
        _
    $region6: #{conv_block_forward.5} parent=1 // loop_footer
      %s15 = sadd.s32 1, %s11
    $region7: #{conv_block_forward.5} parent=1 // loop_footer_branch
      %10 = sbr.rel target = $region3
    $region8: #{conv_block_forward.5} parent=1 // loop_exit
      _
    %226 = vsyncpa [#allocation3], 1
    %s227 = scalar_lea.sflag [#allocation3], 1
    %228 = vsyncpa %s227, 1

// kernel: conv_block_forward.4
$region0: #{conv_block_forward.4}
  #allocation0 [shape = 'u32[]', space=smem, size = 0x4, offset = 0x4, fixed_abs, tag = 'smem constant byte address 0x4 - core index']
  #allocation1 [shape = 'u32[72,128]{1,0:T(1,128)}', space=vmem, size = 0x9000, scoped, tag = 'internal scratch']
  #allocation2 [shape = 'bf16[24,16]{1,0:T(8,128)(2,1)}', space=vmem, size = 0x1800, scoped, tag = 'scratch operand']
  %s0 = inlined_call_operand.vmem [shape: bf16[2,8,16], index: 0, kind: input, shape index: {}, may-alias: {0,3}]
  %s1 = inlined_call_operand.vmem [shape: f32[2,8,2], index: 1, kind: input, shape index: {}]
  %s2 = inlined_call_operand.vmem [shape: bf16[8,24], index: 2, kind: input, shape index: {}]
  %s3 = inlined_call_operand.vmem [shape: bf16[2,8,16], index: 3, kind: output, shape index: {0}, may-alias: {0,3}]
  %s4 = inlined_call_operand.vmem [shape: f32[2,8,2], index: 4, kind: output, shape index: {1}]
  %5 = xla_tuple %s3, %s4
  %s6 = sld [smem:[#allocation0]]
  $region53: #{conv_block_forward.4} parent=0
    _
  %s8 = ssub.s32 1, %s6
  %s9 = scalar_select 0, %s8, %s6
  loop: start=0, step=1, limit=4
  $region2: #{conv_block_forward.4} parent=0 // loop_pre_header
    _
  $region3: #{conv_block_forward.4} parent=0 // loop_header
    %s11 = sphi 0, %s15
    %p12 = scmp.ge.s32.totalorder %s11, 4
    %s21 = sphi 0, %s23
    %s24 = sphi 0, %s21
    %s25 = sphi 0, %s24
    %s41 = sphi 0, %s25
    %s47 = sphi 0, %s49
    %s50 = sphi 0, %s47
    %s51 = sphi 0, %s50
    %s67 = sphi 0, %s51
    %s71 = sphi 0, %s71
    %s73 = sphi 0, %s71
    %s74 = sphi 0, %s73
    %s88 = sphi 0, %s74
    %s94 = sphi 0, %s96
    %s97 = sphi 0, %s94
    %s98 = sphi 0, %s97
    %s114 = sphi 0, %s98
    %s120 = sphi 0, %s122
    %s123 = sphi 0, %s120
    %s124 = sphi 0, %s123
    %s140 = sphi 0, %s124
  $region4: #{conv_block_forward.4} parent=0 // loop_header_branch
    %14 = sbr.rel (%p12) target = $region8
  $region5: #{conv_block_forward.4} parent=0 // loop_body
    %s16 = ssub.s32 %s11, 1
    %s17 = ssub.s32 %s11, 2
    %s18 = sadd.s32 %s11, 1
    %s19 = ssub.s32 %s11, %s18
    %p20 = scmp.eq.s32.totalorder %s19, 0
    %s22 = sadd.s32 %s21, 1
    %s23 = scalar_select %p20, %s21, %s22
    %p26 = pneg %p20
    %p27 = scmp.eq.s32.totalorder %s11, 1
    %p28 = por %p26, %p27
    %p29 = scmp.ne.s32.totalorder %s21, %s24
    %p30 = scmp.eq.s32.totalorder %s11, 0
    %p31 = por %p29, %p30
    %p32 = scmp.ne.s32.totalorder %s21, %s24
    %p33 = scmp.eq.s32.totalorder %s16, 1
    %p34 = por %p32, %p33
    %p35 = scmp.ne.s32.totalorder %s24, %s25
    %p36 = scmp.eq.s32.totalorder %s16, 0
    %p37 = por %p35, %p36
    %p38 = scmp.ne.s32.totalorder %s24, %s25
    %p39 = scmp.eq.s32.totalorder %s17, 1
    %p40 = por %p38, %p39
    %p42 = scmp.ne.s32.totalorder %s25, %s41
    %p43 = scmp.eq.s32.totalorder %s17, 0
    %p44 = por %p42, %p43
    %s45 = ssub.s32 %s11, %s18
    %p46 = scmp.eq.s32.totalorder %s45, 0
    %s48 = sadd.s32 %s47, 1
    %s49 = scalar_select %p46, %s47, %s48
    %p52 = pneg %p46
    %p53 = scmp.eq.s32.totalorder %s11, 1
    %p54 = por %p52, %p53
    %p55 = scmp.ne.s32.totalorder %s47, %s50
    %p56 = scmp.eq.s32.totalorder %s11, 0
    %p57 = por %p55, %p56
    %p58 = scmp.ne.s32.totalorder %s47, %s50
    %p59 = scmp.eq.s32.totalorder %s16, 1
    %p60 = por %p58, %p59
    %p61 = scmp.ne.s32.totalorder %s50, %s51
    %p62 = scmp.eq.s32.totalorder %s16, 0
    %p63 = por %p61, %p62
    %p64 = scmp.ne.s32.totalorder %s50, %s51
    %p65 = scmp.eq.s32.totalorder %s17, 1
    %p66 = por %p64, %p65
    %p68 = scmp.ne.s32.totalorder %s51, %s67
    %p69 = scmp.eq.s32.totalorder %s17, 0
    %p70 = por %p68, %p69
    %s72 = sadd.s32 %s71, 1
    %p75 = scmp.eq.s32.totalorder %s11, 1
    %p76 = scmp.ne.s32.totalorder %s71, %s73
    %p77 = scmp.eq.s32.totalorder %s11, 0
    %p78 = por %p76, %p77
    %p79 = scmp.ne.s32.totalorder %s71, %s73
    %p80 = scmp.eq.s32.totalorder %s16, 1
    %p81 = por %p79, %p80
    %p82 = scmp.ne.s32.totalorder %s73, %s74
    %p83 = scmp.eq.s32.totalorder %s16, 0
    %p84 = por %p82, %p83
    %p85 = scmp.ne.s32.totalorder %s73, %s74
    %p86 = scmp.eq.s32.totalorder %s17, 1
    %p87 = por %p85, %p86
    %p89 = scmp.ne.s32.totalorder %s74, %s88
    %p90 = scmp.eq.s32.totalorder %s17, 0
    %p91 = por %p89, %p90
    %s92 = ssub.s32 %s11, %s18
    %p93 = scmp.eq.s32.totalorder %s92, 0
    %s95 = sadd.s32 %s94, 1
    %s96 = scalar_select %p93, %s94, %s95
    %p99 = pneg %p93
    %p100 = scmp.eq.s32.totalorder %s11, 1
    %p101 = por %p99, %p100
    %p102 = scmp.ne.s32.totalorder %s94, %s97
    %p103 = scmp.eq.s32.totalorder %s11, 0
    %p104 = por %p102, %p103
    %p105 = scmp.ne.s32.totalorder %s94, %s97
    %p106 = scmp.eq.s32.totalorder %s16, 1
    %p107 = por %p105, %p106
    %p108 = scmp.ne.s32.totalorder %s97, %s98
    %p109 = scmp.eq.s32.totalorder %s16, 0
    %p110 = por %p108, %p109
    %p111 = scmp.ne.s32.totalorder %s97, %s98
    %p112 = scmp.eq.s32.totalorder %s17, 1
    %p113 = por %p111, %p112
    %p115 = scmp.ne.s32.totalorder %s98, %s114
    %p116 = scmp.eq.s32.totalorder %s17, 0
    %p117 = por %p115, %p116
    %s118 = ssub.s32 %s11, %s18
    %p119 = scmp.eq.s32.totalorder %s118, 0
    %s121 = sadd.s32 %s120, 1
    %s122 = scalar_select %p119, %s120, %s121
    %p125 = pneg %p119
    %p126 = scmp.eq.s32.totalorder %s11, 1
    %p127 = por %p125, %p126
    %p128 = scmp.ne.s32.totalorder %s120, %s123
    %p129 = scmp.eq.s32.totalorder %s11, 0
    %p130 = por %p128, %p129
    %p131 = scmp.ne.s32.totalorder %s120, %s123
    %p132 = scmp.eq.s32.totalorder %s16, 1
    %p133 = por %p131, %p132
    %p134 = scmp.ne.s32.totalorder %s123, %s124
    %p135 = scmp.eq.s32.totalorder %s16, 0
    %p136 = por %p134, %p135
    %p137 = scmp.ne.s32.totalorder %s123, %s124
    %p138 = scmp.eq.s32.totalorder %s17, 1
    %p139 = por %p137, %p138
    %p141 = scmp.ne.s32.totalorder %s124, %s140
    %p142 = scmp.eq.s32.totalorder %s17, 0
    %p143 = por %p141, %p142
    %p144 = scmp.le.s32.totalorder 1, %s11
    %p145 = scmp.lt.s32.totalorder %s11, 3
    %p146 = pnand %p144, %p145
    %p147 = pneg %p146
    // Predicated region
    $region9: #{conv_block_forward.4} parent=5 // pred_check
      _
    $region10: #{conv_block_forward.4} parent=5 // pred_check_branch
      %149 = sbr.rel (%p146) target = $region12
    $region11: #{conv_block_forward.4} parent=5 // pred_region
      %s150 = ssub.s32 %s11, 1
      // Predicated region
      $region13: #{conv_block_forward.4} parent=11 // pred_check
        %p151 = pneg %p84
      $region14: #{conv_block_forward.4} parent=11 // pred_check_branch
        %153 = sbr.rel (%p151) target = $region16
      $region15: #{conv_block_forward.4} parent=11 // pred_region
        _
      $region16: #{conv_block_forward.4} parent=11 // pred_fallthru
        _
    $region12: #{conv_block_forward.4} parent=5 // pred_fallthru
      _
    %p154 = scmp.lt.s32.totalorder %s11, 2
    // Predicated region
    $region17: #{conv_block_forward.4} parent=5 // pred_check
      %p155 = pneg %p154
    $region18: #{conv_block_forward.4} parent=5 // pred_check_branch
      %157 = sbr.rel (%p155) target = $region20
    $region19: #{conv_block_forward.4} parent=5 // pred_region
      // Predicated region
      $region21: #{conv_block_forward.4} parent=19 // pred_check
        %p158 = pneg %p31
      $region22: #{conv_block_forward.4} parent=19 // pred_check_branch
        %160 = sbr.rel (%p158) target = $region24
      $region23: #{conv_block_forward.4} parent=19 // pred_region
        %p161 = scmp.lt.s32.totalorder %s11, 1
        %s162 = scalar_select %p161, %s11, 1
        %s163 = smul.addr %s162, 4
        %s164 = scalar_lea.vmem %s0, %s163
      $region24: #{conv_block_forward.4} parent=19 // pred_fallthru
        _
      // Predicated region
      $region25: #{conv_block_forward.4} parent=19 // pred_check
        %p165 = pneg %p57
      $region26: #{conv_block_forward.4} parent=19 // pred_check_branch
        %167 = sbr.rel (%p165) target = $region28
      $region27: #{conv_block_forward.4} parent=19 // pred_region
        %p168 = scmp.lt.s32.totalorder %s11, 1
        %s169 = scalar_select %p168, %s11, 1
        %s170 = smul.addr %s169, 8
        %s171 = scalar_lea.vmem %s1, %s170
      $region28: #{conv_block_forward.4} parent=19 // pred_fallthru
        _
    $region20: #{conv_block_forward.4} parent=5 // pred_fallthru
      _
    %p172 = scmp.le.s32.totalorder 1, %s11
    %p173 = scmp.lt.s32.totalorder %s11, 3
    %p174 = pnand %p172, %p173
    %p175 = pneg %p174
    // Predicated region
    $region29: #{conv_block_forward.4} parent=5 // pred_check
      _
    $region30: #{conv_block_forward.4} parent=5 // pred_check_branch
      %177 = sbr.rel (%p174) target = $region32
    $region31: #{conv_block_forward.4} parent=5 // pred_region
      %s178 = ssub.s32 %s11, 1
      %p179 = scmp.lt.s32.totalorder %s16, 1
      %s180 = scalar_select %p179, %s16, 1
      %s181 = smul.addr %s180, 4
      %s182 = scalar_lea.vmem %s0, %s181
      %p183 = pneg %p37
      %p184 = pneg %p34
      %p185 = scmp.lt.s32.totalorder %s16, 1
      %s186 = scalar_select %p185, %s16, 1
      %s187 = smul.addr %s186, 8
      %s188 = scalar_lea.vmem %s1, %s187
      %p189 = pneg %p63
      %p190 = pneg %p60
      %p191 = pneg %p84
      %p192 = pneg %p81
      %p193 = pneg %p110
      %p194 = pneg %p107
      %p195 = scmp.lt.s32.totalorder %s16, 1
      %s196 = scalar_select %p195, %s16, 1
      %s197 = smul.addr %s196, 4
      %s198 = scalar_lea.vmem %s3, %s197
      %p199 = pneg %p136
      %p200 = pneg %p133
      %p201 = scmp.lt.s32.totalorder %s16, 1
      %s202 = scalar_select %p201, %s16, 1
      %s203 = smul.addr %s202, 8
      %s204 = scalar_lea.vmem %s4, %s203
      %p205 = scmp.lt.s32.totalorder %s16, 1
      %s206 = scalar_select %p205, %s16, 1
      %s207 = smul.addr %s206, 4
      %s208 = scalar_lea.vmem %s0, %s207
      %p209 = scmp.lt.s32.totalorder %s16, 1
      %s210 = scalar_select %p209, %s16, 1
      %s211 = smul.addr %s210, 8
      %s212 = scalar_lea.vmem %s1, %s211
      %p213 = scmp.lt.s32.totalorder %s16, 1
      %s214 = scalar_select %p213, %s16, 1
      %s215 = smul.addr %s214, 4
      %s216 = scalar_lea.vmem %s3, %s215
      %p217 = scmp.lt.s32.totalorder %s16, 1
      %s218 = scalar_select %p217, %s16, 1
      %s219 = smul.addr %s218, 8
      %s220 = scalar_lea.vmem %s4, %s219
      %v222 = vld [vmem:[%s212] sm:$0xff]
      %v223 = vld [vmem:[%s208] sm:$0xf]
      %v224 = vunpack.c.l.bf16 %v223
      %226 = vset.pattern.permute.xlu0 0
      %227 = vperm.xlu0 %226, %v222
      %v228 = vpop.permute.xlu0 %227
      %v230 = vmul.f32 %v224, %v228
      %231 = vset.pattern.permute.xlu0 1
      %232 = vperm.xlu0 %231, %v222
      %v233 = vpop.permute.xlu0 %232
      %v235 = vadd.f32 %v230, %v233
      %v236 = vxor.u32 %v235, 2147483648
      %v237 = vmul.f32 %v236, 1.442695
      %v238 = vpow.pop %v237
      %v239 = vadd.f32 %v238, 1.0
      %v240 = vrcp.pop %v239
      %v241 = vmul.f32 %v239, %v240
      %v242 = vsub.f32 1.0, %v241
      %v243 = vmul.f32 %v240, %v242
      %v244 = vadd.f32 %v240, %v243
      %vm245 = vweird.f32 %v239
      %vm246 = vweird.f32 %v240
      %vm247 = vmor %vm245, %vm246
      %v248 = vsel %vm247, %v240, %v244
      %v249 = vand.u32 2147483647, %v239
      %vm250 = vcmp.eq.f32.partialorder %v249, 8.507059e+37
      %v251 = vand.u32 %v239, 2147483648
      %v252 = vor.u32 1.1754944e-38, %v251
      %v253 = vsel %vm250, %v252, %v248
      %v254 = vmul.f32 1.0, %v253
      %v255 = vmul.f32 %v235, %v254
      %v256 = vpack.c.bf16 %v255, %v255
      %v258 = vunpack.c.l.b16 %v256
      %v259 = vpack.c.b16 %v258, %v258
      %260 = vrot.lane.b32.xlu0 %v259, 1
      %v261 = vpop.permute.xlu0 %260
      %vm262 = vcmask 7168
      %v265 = vsel %vm262, 0, %v261
      %266 = vrot.lane.b32.xlu0 %v259, 127
      %v267 = vpop.permute.xlu0 %266
      %vm268 = vcmask 121856
      %v270 = vsel %vm268, %v267, 0
      %vm271 = vcmask 1043456
      %v273 = vsel %vm271, %v265, %v259
      %v276 = vunpack.c.l.b16 %v273
      %v277 = vunpack.c.h.b16 %v273
      %v278 = vunpack.c.l.b16 %v270
      %v279 = vpack.c.b16 %v276, %v276
      %v280 = vpack.c.b16 %v277, %v277
      %v281 = vpack.c.b16 %v278, %v278
      %vm285 = vcmask 125952
      %286 = vst.msk [vmem:[#allocation2] sm:$0xf] %vm285, %v279
      %287 = vst.msk [vmem:[#allocation2 + $0x4] sm:$0xf] %vm285, %v280
      %288 = vst.msk [vmem:[#allocation2 + $0x8] sm:$0xf] %vm285, %v281
      %v289 = vld [vmem:[%s2] sm:$0xf]
      %v290 = vld [vmem:[#allocation2] sm:$0xf]
      %v291 = vld [vmem:[#allocation2 + $0x4] sm:$0xf]
      %v292 = vld [vmem:[#allocation2 + $0x8] sm:$0xf]
      %v296 = vunpack.c.l.b16 %v290
      %v297 = vunpack.c.l.b16 %v291
      %v298 = vunpack.c.l.b16 %v292
      %v299 = vpack.c.b16 %v297, %v296
      %v300 = vpack.c.b16 %v298, %v298
      %vm302 = vcmask 195584
      %v304 = vsel %vm302, %v289, 0
      %v307 = vsel %vm271, %v300, 0
      %309 = vmatpush.bf16.msra.mxu0 0
      %310 = vmatpush.bf16.msra.mxu0 0
      %311 = vmatpush.bf16.msra.mxu0 0
      %312 = vmatpush.bf16.msra.mxu0 0
      %313 = vmatpush.bf16.msra.mxu0 0
      %314 = vmatpush.bf16.msra.mxu0 0
      %315 = vmatpush.bf16.msra.mxu0 %v307
      %316 = vmatpush.bf16.msra.mxu0 %v299
      %317 = vmatmul.bf16.gmra.mxu0 %v304
      %v318 = vpop.f32.mrf.mxu0
      %v319 = vadd.f32 0.0, %v318
      %v320 = vpop.f32.mrf.mxu0
      %321 = vdwg.mxu0
      %vm322 = vcmask 130048
      %v323 = vsel %vm322, %v319, 0.0
      %324 = vadd.xlane.f32.xlu0 %v323
      %v325 = vpop.xlane.xlu0 %324
      %v326 = vmul.f32 %v319, %v319
      %v327 = vsel %vm322, %v326, 0.0
      %328 = vadd.xlane.f32.xlu0 %v327
      %v329 = vpop.xlane.xlu0 %328
      %v330 = vsel %vm262, %v325, %v329
      %vm331 = vcmask 15360
      %332 = vst.msk [vmem:[%s220] sm:$0xff] %vm331, %v330
      %v333 = vpack.c.bf16 %v319, %v319
      %334 = vst.msk [vmem:[%s216] sm:$0xf] %vm285, %v333
      %p335 = scmp.lt.s32.totalorder %s16, 1
      %s336 = scalar_select %p335, %s16, 1
      %s337 = smul.addr %s336, 4
      %s338 = scalar_lea.vmem %s3, %s337
      %p339 = scmp.lt.s32.totalorder %s16, 1
      %s340 = scalar_select %p339, %s16, 1
      %s341 = smul.addr %s340, 8
      %s342 = scalar_lea.vmem %s4, %s341
      // Predicated region
      $region33: #{conv_block_forward.4} parent=31 // pred_check
        %p343 = pneg %p107
      $region34: #{conv_block_forward.4} parent=31 // pred_check_branch
        %345 = sbr.rel (%p343) target = $region36
      $region35: #{conv_block_forward.4} parent=31 // pred_region
        _
      $region36: #{conv_block_forward.4} parent=31 // pred_fallthru
        _
      // Predicated region
      $region37: #{conv_block_forward.4} parent=31 // pred_check
        %p346 = pneg %p133
      $region38: #{conv_block_forward.4} parent=31 // pred_check_branch
        %348 = sbr.rel (%p346) target = $region40
      $region39: #{conv_block_forward.4} parent=31 // pred_region
        _
      $region40: #{conv_block_forward.4} parent=31 // pred_fallthru
        _
    $region32: #{conv_block_forward.4} parent=5 // pred_fallthru
      _
    %p349 = scmp.le.s32.totalorder 2, %s11
    // Predicated region
    $region41: #{conv_block_forward.4} parent=5 // pred_check
      %p350 = pneg %p349
    $region42: #{conv_block_forward.4} parent=5 // pred_check_branch
      %352 = sbr.rel (%p350) target = $region44
    $region43: #{conv_block_forward.4} parent=5 // pred_region
      %s353 = ssub.s32 %s11, 2
      // Predicated region
      $region45: #{conv_block_forward.4} parent=43 // pred_check
        %p354 = pneg %p113
      $region46: #{conv_block_forward.4} parent=43 // pred_check_branch
        %356 = sbr.rel (%p354) target = $region48
      $region47: #{conv_block_forward.4} parent=43 // pred_region
        %p357 = scmp.lt.s32.totalorder %s17, 1
        %s358 = scalar_select %p357, %s17, 1
        %s359 = smul.addr %s358, 4
        %s360 = scalar_lea.vmem %s3, %s359
      $region48: #{conv_block_forward.4} parent=43 // pred_fallthru
        _
      // Predicated region
      $region49: #{conv_block_forward.4} parent=43 // pred_check
        %p361 = pneg %p139
      $region50: #{conv_block_forward.4} parent=43 // pred_check_branch
        %363 = sbr.rel (%p361) target = $region52
      $region51: #{conv_block_forward.4} parent=43 // pred_region
        %p364 = scmp.lt.s32.totalorder %s17, 1
        %s365 = scalar_select %p364, %s17, 1
        %s366 = smul.addr %s365, 8
        %s367 = scalar_lea.vmem %s4, %s366
      $region52: #{conv_block_forward.4} parent=43 // pred_fallthru
        _
    $region44: #{conv_block_forward.4} parent=5 // pred_fallthru
      _
  $region6: #{conv_block_forward.4} parent=0 // loop_footer
    %s15 = sadd.s32 1, %s11
  $region7: #{conv_block_forward.4} parent=0 // loop_footer_branch
    %10 = sbr.rel target = $region3
  $region8: #{conv_block_forward.4} parent=0 // loop_exit
    _

</llo_original>
